<compile_context>
chip_gen: v7x
topology: tpu7x:2x2x1
jax: 0.10.0
libtpu: 0.0.40
codegen_flags: <defaults>
</compile_context>

<pallas_src>
import jax
import jax.numpy as jnp
from jax.experimental import pallas as pl
from jax.experimental.pallas import tpu as pltpu


def dqn_kernel(x_ref, w1_ref, b1_ref, w2_ref, b2_ref, o_ref):
    # x_ref:  (tile_b, state_dim)        [compute dtype, e.g. bf16]
    # w1_ref: (state_dim, hidden_dim)    [compute dtype]
    # b1_ref: (1, hidden_dim)            [f32]
    # w2_ref: (hidden_dim, n_pad)        [compute dtype, n_pad % 128 == 0]
    # b2_ref: (1, n_pad)                 [f32]
    # o_ref:  (tile_b, n_pad)            [out dtype, default bf16]
    h = jnp.dot(x_ref[...], w1_ref[...],
                preferred_element_type=jnp.float32) + b1_ref[...]
    # Sigmoid via a single EUP transcendental (tanh); the 0.5* and +1.0 ride
    # the 4-wide VALU.  sigmoid(x) == 0.5 * (tanh(x/2) + 1).
    h = 0.5 * (jnp.tanh(0.5 * h) + 1.0)
    y = jnp.dot(h.astype(w2_ref.dtype), w2_ref[...],
                preferred_element_type=jnp.float32) + b2_ref[...]
    o_ref[...] = y.astype(o_ref.dtype)


def prepare_params(w1, b1, w2, b2, *, compute_dtype=jnp.bfloat16):
    """One-time weight preparation (hoisted out of the per-call hot path).

    Pads W2/b2 to a lane-dense multiple of 128 output columns, casts weights
    to the compute dtype (bf16 streams, f32 MXU accumulation in-kernel), and
    keeps biases in f32.
    """
    state_dim, hidden_dim = w1.shape
    action_dim = w2.shape[1]
    n_pad = max(128, pl.cdiv(action_dim, 128) * 128)

    b1 = jnp.reshape(b1, (1, hidden_dim)).astype(jnp.float32)
    b2 = jnp.reshape(b2, (1, action_dim)).astype(jnp.float32)

    w1_c = w1.astype(compute_dtype)
    w2_p = jnp.pad(w2, ((0, 0), (0, n_pad - action_dim))).astype(compute_dtype)
    b2_p = jnp.pad(b2, ((0, 0), (0, n_pad - action_dim)))

    return dict(w1=w1_c, b1=b1, w2=w2_p, b2=b2_p,
                state_dim=int(state_dim), hidden_dim=int(hidden_dim),
                action_dim=int(action_dim), n_pad=int(n_pad))


def _choose_batch_tiling(B, tb, min_tiles=2):
    """Pick (tile_b, b_pad, num_tiles).

    * tile_b is a multiple of 16 (bf16 sublane tile) and <= tb (budget).
    * num_tiles is the smallest count that fits the budget, bumped to >= 2
      when B >= 32 so the single grid axis can shard across v7x's 2 TCs.
    * tile_b = round_up(cdiv(B, num_tiles), 16) keeps last-tile padding small.
    """
    b16 = max(16, pl.cdiv(B, 16) * 16)
    num_tiles = pl.cdiv(b16, tb)
    if num_tiles < min_tiles and b16 >= min_tiles * 16:
        num_tiles = min_tiles
    tile_b = pl.cdiv(pl.cdiv(b16, num_tiles), 16) * 16
    b_pad = tile_b * num_tiles
    return tile_b, b_pad, num_tiles


def simple_dqn_forward(x, params, *, tb=512, out_dtype=jnp.bfloat16):
    """Fused MLP forward.  x: (B, state_dim).  Returns (B, action_dim)."""
    B, state_dim = x.shape
    assert state_dim == params["state_dim"]
    hidden_dim = params["hidden_dim"]
    action_dim = params["action_dim"]
    n_pad = params["n_pad"]
    compute_dtype = params["w1"].dtype

    tile_b, b_pad, num_tiles = _choose_batch_tiling(B, tb)
    x_p = x if b_pad == B else jnp.pad(x, ((0, b_pad - B), (0, 0)))
    x_c = x_p.astype(compute_dtype)

    nbytes = lambda a: int(a.size) * a.dtype.itemsize
    out_itemsize = jnp.dtype(out_dtype).itemsize
    cost = pl.CostEstimate(
        flops=2 * b_pad * (state_dim * hidden_dim + hidden_dim * n_pad),
        transcendentals=b_pad * hidden_dim,
        bytes_accessed=int(nbytes(x_c) + nbytes(params["w1"])
                           + nbytes(params["b1"]) + nbytes(params["w2"])
                           + nbytes(params["b2"])
                           + b_pad * n_pad * out_itemsize),
    )

    out = pl.pallas_call(
        dqn_kernel,
        out_shape=jax.ShapeDtypeStruct((b_pad, n_pad), out_dtype),
        grid_spec=pltpu.PrefetchScalarGridSpec(
            num_scalar_prefetch=0,
            grid=(num_tiles,),
            in_specs=[
                # Batch-tiled activation stream (double-buffered by Pallas).
                pl.BlockSpec((tile_b, state_dim), lambda i: (i, 0)),
                # Grid-invariant weights/biases: constant index_map -> kept
                # resident in VMEM across grid steps (no per-step refetch).
                pl.BlockSpec((state_dim, hidden_dim), lambda i: (0, 0)),
                pl.BlockSpec((1, hidden_dim), lambda i: (0, 0)),
                pl.BlockSpec((hidden_dim, n_pad), lambda i: (0, 0)),
                pl.BlockSpec((1, n_pad), lambda i: (0, 0)),
            ],
            out_specs=pl.BlockSpec((tile_b, n_pad), lambda i: (i, 0)),
        ),
        compiler_params=pltpu.CompilerParams(
            dimension_semantics=("parallel",),
        ),
        cost_estimate=cost,
    )(x_c, params["w1"], params["b1"], params["w2"], params["b2"])

    # Strip batch padding and output lane padding.
    return out[:B, :action_dim]


def init_params(key, state_dim, action_dim, hidden_dim=128):
    """Deterministic init mimicking nn.Linear's U(-1/sqrt(fan_in), 1/sqrt(fan_in))."""
    k1, k2, k3, k4 = jax.random.split(key, 4)
    bound1 = 1.0 / jnp.sqrt(state_dim)
    bound2 = 1.0 / jnp.sqrt(hidden_dim)
    w1 = jax.random.uniform(k1, (state_dim, hidden_dim), jnp.float32, -bound1, bound1)
    b1 = jax.random.uniform(k2, (1, hidden_dim), jnp.float32, -bound1, bound1)
    w2 = jax.random.uniform(k3, (hidden_dim, action_dim), jnp.float32, -bound2, bound2)
    b2 = jax.random.uniform(k4, (1, action_dim), jnp.float32, -bound2, bound2)
    return w1, b1, w2, b2


if __name__ == "__main__":
    key = jax.random.PRNGKey(0)
    kx, kp = jax.random.split(key)

    batch = 16
    state_dim = 32
    action_dim = 8
    hidden_dim = 128  # module default

    x = jax.random.normal(kx, (batch, state_dim), jnp.float32)
    w1, b1, w2, b2 = init_params(kp, state_dim, action_dim, hidden_dim)

    # Weight prep done once, outside the per-step forward path.
    params = prepare_params(w1, b1, w2, b2)

    out = simple_dqn_forward(x, params)  # B=16 -> single 16-row grid step
    out = jax.block_until_ready(out)

    # Pure-JAX f32 reference; tolerance covers bf16 input/weight/output streams.
    ref = jax.nn.sigmoid(x @ w1 + b1) @ w2 + b2
    assert out.shape == (batch, action_dim)
    assert jnp.allclose(out.astype(jnp.float32), ref, atol=2e-2, rtol=2e-2)

    print("KERNEL_OK")
</pallas_src>

<mosaic_0001>
module attributes {stable_mosaic.version = 11 : i64} {
  func.func @dqn_kernel(%arg0: i32, %arg1: memref<16x32xbf16, #tpu.memory_space<vmem>>, %arg2: memref<32x128xbf16, #tpu.memory_space<vmem>>, %arg3: memref<1x128xf32, #tpu.memory_space<vmem>>, %arg4: memref<128x128xbf16, #tpu.memory_space<vmem>>, %arg5: memref<1x128xf32, #tpu.memory_space<vmem>>, %arg6: memref<16x128xbf16, #tpu.memory_space<vmem>>) attributes {dimension_semantics = [#tpu.dimension_semantics<parallel>], iteration_bounds = array<i64: 1>, scalar_prefetch = 0 : i64, scratch_operands = 0 : i64, tpu.core_type = #tpu.core_type<tc>, window_params = [{transform_indices = @transform_0, window_bounds = array<i64: 16, 32>}, {pipeline_mode = #tpu.pipeline_mode<synchronous>, transform_indices = @transform_1, window_bounds = array<i64: 32, 128>}, {pipeline_mode = #tpu.pipeline_mode<synchronous>, transform_indices = @transform_2, window_bounds = array<i64: 1, 128>}, {pipeline_mode = #tpu.pipeline_mode<synchronous>, transform_indices = @transform_3, window_bounds = array<i64: 128, 128>}, {pipeline_mode = #tpu.pipeline_mode<synchronous>, transform_indices = @transform_4, window_bounds = array<i64: 1, 128>}, {transform_indices = @transform_5, window_bounds = array<i64: 16, 128>}]} {
    %c0 = arith.constant 0 : index
    %c0_0 = arith.constant 0 : index
    %0 = vector.load %arg1[%c0, %c0_0] : memref<16x32xbf16, #tpu.memory_space<vmem>>, vector<16x32xbf16>
    %c0_1 = arith.constant 0 : index
    %c0_2 = arith.constant 0 : index
    %1 = vector.load %arg2[%c0_1, %c0_2] : memref<32x128xbf16, #tpu.memory_space<vmem>>, vector<32x128xbf16>
    %cst = arith.constant dense<0.000000e+00> : vector<16x128xf32>
    %2 = tpu.matmul %0, %1, %cst {dimension_numbers = #tpu.dot_dimension_numbers<[1], [0], [0], [1], [0, 0, 1, 1], [], []>} : vector<16x32xbf16>, vector<32x128xbf16>, vector<16x128xf32> -> vector<16x128xf32>
    %c0_3 = arith.constant 0 : index
    %c0_4 = arith.constant 0 : index
    %3 = vector.load %arg3[%c0_3, %c0_4] : memref<1x128xf32, #tpu.memory_space<vmem>>, vector<1x128xf32>
    %4 = vector.broadcast %3 : vector<1x128xf32> to vector<16x128xf32>
    %5 = arith.addf %2, %4 : vector<16x128xf32>
    %cst_5 = arith.constant 5.000000e-01 : f32
    %6 = vector.broadcast %cst_5 : f32 to vector<16x128xf32>
    %7 = arith.mulf %6, %5 : vector<16x128xf32>
    %8 = math.tanh %7 : vector<16x128xf32>
    %cst_6 = arith.constant 1.000000e+00 : f32
    %9 = vector.broadcast %cst_6 : f32 to vector<16x128xf32>
    %10 = arith.addf %8, %9 : vector<16x128xf32>
    %cst_7 = arith.constant 5.000000e-01 : f32
    %11 = vector.broadcast %cst_7 : f32 to vector<16x128xf32>
    %12 = arith.mulf %11, %10 : vector<16x128xf32>
    %13 = arith.truncf %12 : vector<16x128xf32> to vector<16x128xbf16>
    %c0_8 = arith.constant 0 : index
    %c0_9 = arith.constant 0 : index
    %14 = vector.load %arg4[%c0_8, %c0_9] : memref<128x128xbf16, #tpu.memory_space<vmem>>, vector<128x128xbf16>
    %cst_10 = arith.constant dense<0.000000e+00> : vector<16x128xf32>
    %15 = tpu.matmul %13, %14, %cst_10 {dimension_numbers = #tpu.dot_dimension_numbers<[1], [0], [0], [1], [0, 0, 1, 1], [], []>} : vector<16x128xbf16>, vector<128x128xbf16>, vector<16x128xf32> -> vector<16x128xf32>
    %c0_11 = arith.constant 0 : index
    %c0_12 = arith.constant 0 : index
    %16 = vector.load %arg5[%c0_11, %c0_12] : memref<1x128xf32, #tpu.memory_space<vmem>>, vector<1x128xf32>
    %17 = vector.broadcast %16 : vector<1x128xf32> to vector<16x128xf32>
    %18 = arith.addf %15, %17 : vector<16x128xf32>
    %19 = arith.truncf %18 : vector<16x128xf32> to vector<16x128xbf16>
    %c0_13 = arith.constant 0 : index
    %c0_14 = arith.constant 0 : index
    %20 = vector.load %arg6[%c0_13, %c0_14] : memref<16x128xbf16, #tpu.memory_space<vmem>>, vector<16x128xbf16>
    tpu.vector_store %arg6[%c0_13, %c0_14], %19 {strides = array<i32>} : memref<16x128xbf16, #tpu.memory_space<vmem>>, vector<16x128xbf16>,
    return
  }
  func.func @transform_0(%arg0: i32) -> (i32, i32) {
    %c0_i32 = arith.constant 0 : i32
    %c0_i32_0 = arith.constant 0 : i32
    return %arg0, %c0_i32 : i32, i32
  }
  func.func @transform_1(%arg0: i32) -> (i32, i32) {
    %c0_i32 = arith.constant 0 : i32
    %c0_i32_0 = arith.constant 0 : i32
    %c0_i32_1 = arith.constant 0 : i32
    return %c0_i32, %c0_i32_0 : i32, i32
  }
  func.func @transform_2(%arg0: i32) -> (i32, i32) {
    %c0_i32 = arith.constant 0 : i32
    %c0_i32_0 = arith.constant 0 : i32
    %c0_i32_1 = arith.constant 0 : i32
    return %c0_i32, %c0_i32_0 : i32, i32
  }
  func.func @transform_3(%arg0: i32) -> (i32, i32) {
    %c0_i32 = arith.constant 0 : i32
    %c0_i32_0 = arith.constant 0 : i32
    %c0_i32_1 = arith.constant 0 : i32
    return %c0_i32, %c0_i32_0 : i32, i32
  }
  func.func @transform_4(%arg0: i32) -> (i32, i32) {
    %c0_i32 = arith.constant 0 : i32
    %c0_i32_0 = arith.constant 0 : i32
    %c0_i32_1 = arith.constant 0 : i32
    return %c0_i32, %c0_i32_0 : i32, i32
  }
  func.func @transform_5(%arg0: i32) -> (i32, i32) {
    %c0_i32 = arith.constant 0 : i32
    %c0_i32_0 = arith.constant 0 : i32
    return %arg0, %c0_i32 : i32, i32
  }
}

</mosaic_0001>

<llo_original>
// kernel: tpu_custom_call.1
$region0: #{tpu_custom_call.1}
  #allocation0 [shape = 'u32[]', space=smem, size = 0x4, offset = 0x4, fixed_abs, tag = 'smem constant byte address 0x4 - core index']
  #allocation1 [shape = 'u32[144,128]{1,0:T(1,128)}', space=vmem, size = 0x12000, scoped, tag = 'internal scratch']
  %s0 = inlined_call_operand.hbm [shape: bf16[16,32], index: 0, kind: input, shape index: {}]
  %s1 = inlined_call_operand.hbm [shape: bf16[32,128], index: 1, kind: input, shape index: {}]
  %s2 = inlined_call_operand.vmem [shape: f32[1,128], index: 2, kind: input, shape index: {}]
  %s3 = inlined_call_operand.hbm [shape: bf16[128,128], index: 3, kind: input, shape index: {}]
  %s4 = inlined_call_operand.vmem [shape: f32[1,128], index: 4, kind: input, shape index: {}]
  %s5 = inlined_call_operand.hbm [shape: bf16[16,128], index: 5, kind: output, shape index: {}]
  %s6 = sld [smem:[#allocation0]]
  $region42: #{tpu_custom_call.1} parent=0
    _
  %s8 = ssub.s32 1, %s6
  %s9 = scalar_select 0, %s8, %s6
  $region1: #{tpu_custom_call.1} parent=0
    #allocation2 [shape = 'u8[4096]{0}', space=vmem, size = 0x1000, scoped, tag = 'input window, operand 0, single buffered']
    #allocation3 [shape = 's32[1]{0}', space=sflag, size = 0x4, scoped, tag = 'scoped memory for tpu_custom_call.1']
    #allocation4 [shape = 's32[1]{0}', space=sflag, size = 0x4, scoped, tag = 'scoped memory for tpu_custom_call.1']
    #allocation5 [shape = 'u8[8192]{0}', space=vmem, size = 0x2000, scoped, tag = 'input window, operand 1, single buffered']
    #allocation6 [shape = 's32[1]{0}', space=sflag, size = 0x4, scoped, tag = 'scoped memory for tpu_custom_call.1']
    #allocation7 [shape = 'u8[32768]{0}', space=vmem, size = 0x8000, scoped, tag = 'input window, operand 3, single buffered']
    #allocation8 [shape = 'u8[4096]{0}', space=vmem, size = 0x1000, scoped, tag = 'output window, operand 0, single buffered']
    %10 = vsyncpa [#allocation3], 0
    %11 = vsyncpa [#allocation6], 0
    %12 = vsyncpa [#allocation4], 0
    // Predicated region
    $region2: #{tpu_custom_call.1} parent=1 // pred_check
      _
    $region3: #{tpu_custom_call.1} parent=1 // pred_check_branch
      %14 = sbr.rel (0) target = $region5
    $region4: #{tpu_custom_call.1} parent=1 // pred_region
      %s16 = ssub.s32 128, 128
      %17 = vsyncadd [#allocation3], %s16
      %s18 = sshll.u32 [#allocation2], 4
      %s19 = int_to_ptr.vmem [resolvable:$true] %s18
      %24 = dma.hbm_to_vmem [thread:$0]  %s0, 128, %s19, [#allocation3], 64, 64, 4
    $region5: #{tpu_custom_call.1} parent=1 // pred_fallthru
      _
    // Predicated region
    $region6: #{tpu_custom_call.1} parent=1 // pred_check
      _
    $region7: #{tpu_custom_call.1} parent=1 // pred_check_branch
      %26 = sbr.rel (0) target = $region9
    $region8: #{tpu_custom_call.1} parent=1 // pred_region
      %s28 = ssub.s32 256, 256
      %29 = vsyncadd [#allocation6], %s28
      %s30 = sshll.u32 [#allocation5], 4
      %s31 = int_to_ptr.vmem [resolvable:$true] %s30
      %36 = dma.hbm_to_vmem [thread:$0]  %s1, 256, %s31, [#allocation6], 64, 64, 4
    $region9: #{tpu_custom_call.1} parent=1 // pred_fallthru
      _
    // Predicated region
    $region10: #{tpu_custom_call.1} parent=1 // pred_check
      _
    $region11: #{tpu_custom_call.1} parent=1 // pred_check_branch
      %38 = sbr.rel (0) target = $region13
    $region12: #{tpu_custom_call.1} parent=1 // pred_region
      _
    $region13: #{tpu_custom_call.1} parent=1 // pred_fallthru
      _
    // Predicated region
    $region14: #{tpu_custom_call.1} parent=1 // pred_check
      _
    $region15: #{tpu_custom_call.1} parent=1 // pred_check_branch
      %40 = sbr.rel (0) target = $region17
    $region16: #{tpu_custom_call.1} parent=1 // pred_region
      %s42 = ssub.s32 1024, 1024
      %43 = vsyncadd [#allocation6], %s42
      %s44 = sshll.u32 [#allocation7], 4
      %s45 = int_to_ptr.vmem [resolvable:$true] %s44
      %50 = dma.hbm_to_vmem [thread:$0]  %s3, 1024, %s45, [#allocation6], 64, 64, 4
    $region17: #{tpu_custom_call.1} parent=1 // pred_fallthru
      _
    // Predicated region
    $region18: #{tpu_custom_call.1} parent=1 // pred_check
      _
    $region19: #{tpu_custom_call.1} parent=1 // pred_check_branch
      %52 = sbr.rel (0) target = $region21
    $region20: #{tpu_custom_call.1} parent=1 // pred_region
      _
    $region21: #{tpu_custom_call.1} parent=1 // pred_fallthru
      _
    // Predicated region
    $region22: #{tpu_custom_call.1} parent=1 // pred_check
      _
    $region23: #{tpu_custom_call.1} parent=1 // pred_check_branch
      %54 = sbr.rel (0) target = $region25
    $region24: #{tpu_custom_call.1} parent=1 // pred_region
      %55 = dma.done [#allocation3], 128
    $region25: #{tpu_custom_call.1} parent=1 // pred_fallthru
      _
    // Predicated region
    $region26: #{tpu_custom_call.1} parent=1 // pred_check
      _
    $region27: #{tpu_custom_call.1} parent=1 // pred_check_branch
      %57 = sbr.rel (0) target = $region29
    $region28: #{tpu_custom_call.1} parent=1 // pred_region
      %58 = dma.done [#allocation6], 256
    $region29: #{tpu_custom_call.1} parent=1 // pred_fallthru
      _
    // Predicated region
    $region30: #{tpu_custom_call.1} parent=1 // pred_check
      _
    $region31: #{tpu_custom_call.1} parent=1 // pred_check_branch
      %60 = sbr.rel (0) target = $region33
    $region32: #{tpu_custom_call.1} parent=1 // pred_region
      %61 = dma.done [#allocation6], 1024
    $region33: #{tpu_custom_call.1} parent=1 // pred_fallthru
      _
    %v63 = vld [vmem:[#allocation2] sm:$0xf]
    %v64 = vld [vmem:[#allocation2 + $0x4] sm:$0xf]
    %v65 = vld [vmem:[#allocation5] sm:$0xf]
    %v66 = vld [vmem:[#allocation5 + $0x4] sm:$0xf]
    %v67 = vld [vmem:[#allocation5 + $0x8] sm:$0xf]
    %v68 = vld [vmem:[#allocation5 + $0xc] sm:$0xf]
    %v69 = vld [vmem:[%s2] sm:$0x1]
    %v71 = vlaneseq
    %v72 = vshrl.u32 %v71, 7
    %v73 = vsub.s32 0, %v72
    %v74 = vrot.slane %v69, %v73
    %v78 = vunpack.c.l.b16 %v63
    %v79 = vunpack.c.l.b16 %v64
    %v80 = vpack.c.b16 %v79, %v78
    %v85 = vunpack.c.l.b16 %v65
    %v86 = vunpack.c.l.b16 %v66
    %v87 = vunpack.c.l.b16 %v67
    %v88 = vunpack.c.l.b16 %v68
    %v89 = vpack.c.b16 %v86, %v85
    %v90 = vpack.c.b16 %v88, %v87
    %vm93 = vcmask 261120
    %v95 = vsel %vm93, %v80, 0
    %97 = vmatprep.subr.bf16.mxu0 0
    %98 = vmatpush1.bf16.msra.mxu0 %v89
    %99 = vmatprep.subr.bf16.mxu0 0
    %100 = vmatpush1.bf16.msra.mxu0 %v90
    %101 = vmatprep.subr.bf16.mxu0 0
    %102 = vmatpush1.bf16.msra.mxu0 0
    %103 = vmatprep.subr.bf16.mxu0 0
    %104 = vmatpush1.bf16.msra.mxu0 0
    %105 = vmatprep.subr.bf16.mxu0 0
    %106 = vmatpush1.bf16.msra.mxu0 0
    %107 = vmatprep.subr.bf16.mxu0 0
    %108 = vmatpush1.bf16.msra.mxu0 0
    %109 = vmatprep.subr.bf16.mxu0 0
    %110 = vmatpush1.bf16.msra.mxu0 0
    %111 = vmatprep.subr.bf16.mxu0 0
    %112 = vmatpush1.bf16.msra.mxu0 0
    %113 = vmatprep.subr.bf16.mxu0 0
    %114 = vmatpush1.bf16.msra.mxu0 0
    %115 = vmatprep.subr.bf16.mxu0 0
    %116 = vmatpush1.bf16.msra.mxu0 0
    %117 = vmatprep.subr.bf16.mxu0 0
    %118 = vmatpush1.bf16.msra.mxu0 0
    %119 = vmatprep.subr.bf16.mxu0 0
    %120 = vmatpush1.bf16.msra.mxu0 0
    %121 = vmatprep.subr.bf16.mxu0 0
    %122 = vmatpush1.bf16.msra.mxu0 0
    %123 = vmatprep.subr.bf16.mxu0 0
    %124 = vmatpush1.bf16.msra.mxu0 0
    %125 = vmatprep.subr.bf16.mxu0 0
    %126 = vmatpush1.bf16.msra.mxu0 0
    %127 = vmatprep.subr.bf16.mxu0 0
    %128 = vmatpush1.bf16.msra.mxu0 0
    %129 = vmatprep.mubr.bf16.mxu0 0
    %130 = vmatmul.mubr.bf16.gmra.mrb[0].mxu0 %v95
    %v131 = vpop.f32.mrb[0].mxu0
    %v132 = vadd.f32 %v74, %v131
    %v133 = vpop.f32.mrb[0].mxu0
    %v134 = vpop.f32.mrb[0].mxu0
    %v135 = vadd.f32 %v74, %v134
    %v136 = vpop.f32.mrb[0].mxu0
    %137 = vdwg.mxu0
    %v138 = vmul.f32 %v132, 0.5
    %v139 = vmul.f32 %v135, 0.5
    %v140 = vtanh.pop %v138
    %v141 = vtanh.pop %v139
    %v142 = vadd.f32 %v140, 1.0
    %v143 = vadd.f32 %v141, 1.0
    %v144 = vmul.f32 %v142, 0.5
    %v145 = vmul.f32 %v143, 0.5
    %v146 = vpack.c.bf16 %v145, %v144
    %v147 = vld [vmem:[#allocation7] sm:$0xf]
    %v148 = vld [vmem:[#allocation7 + $0x4] sm:$0xf]
    %v149 = vld [vmem:[#allocation7 + $0x8] sm:$0xf]
    %v150 = vld [vmem:[#allocation7 + $0xc] sm:$0xf]
    %v151 = vld [vmem:[#allocation7 + $0x10] sm:$0xf]
    %v152 = vld [vmem:[#allocation7 + $0x14] sm:$0xf]
    %v153 = vld [vmem:[#allocation7 + $0x18] sm:$0xf]
    %v154 = vld [vmem:[#allocation7 + $0x1c] sm:$0xf]
    %v155 = vld [vmem:[#allocation7 + $0x20] sm:$0xf]
    %v156 = vld [vmem:[#allocation7 + $0x24] sm:$0xf]
    %v157 = vld [vmem:[#allocation7 + $0x28] sm:$0xf]
    %v158 = vld [vmem:[#allocation7 + $0x2c] sm:$0xf]
    %v159 = vld [vmem:[#allocation7 + $0x30] sm:$0xf]
    %v160 = vld [vmem:[#allocation7 + $0x34] sm:$0xf]
    %v161 = vld [vmem:[#allocation7 + $0x38] sm:$0xf]
    %v162 = vld [vmem:[#allocation7 + $0x3c] sm:$0xf]
    %v163 = vld [vmem:[%s4] sm:$0x1]
    %v165 = vlaneseq
    %v166 = vshrl.u32 %v165, 7
    %v167 = vsub.s32 0, %v166
    %v168 = vrot.slane %v163, %v167
    %v186 = vunpack.c.l.b16 %v147
    %v187 = vunpack.c.l.b16 %v148
    %v188 = vunpack.c.l.b16 %v149
    %v189 = vunpack.c.l.b16 %v150
    %v190 = vunpack.c.l.b16 %v151
    %v191 = vunpack.c.l.b16 %v152
    %v192 = vunpack.c.l.b16 %v153
    %v193 = vunpack.c.l.b16 %v154
    %v194 = vunpack.c.l.b16 %v155
    %v195 = vunpack.c.l.b16 %v156
    %v196 = vunpack.c.l.b16 %v157
    %v197 = vunpack.c.l.b16 %v158
    %v198 = vunpack.c.l.b16 %v159
    %v199 = vunpack.c.l.b16 %v160
    %v200 = vunpack.c.l.b16 %v161
    %v201 = vunpack.c.l.b16 %v162
    %v202 = vpack.c.b16 %v187, %v186
    %v203 = vpack.c.b16 %v189, %v188
    %v204 = vpack.c.b16 %v191, %v190
    %v205 = vpack.c.b16 %v193, %v192
    %v206 = vpack.c.b16 %v195, %v194
    %v207 = vpack.c.b16 %v197, %v196
    %v208 = vpack.c.b16 %v199, %v198
    %v209 = vpack.c.b16 %v201, %v200
    %218 = vmatprep.subr.bf16.mxu0 0
    %219 = vmatpush1.bf16.msra.mxu0 %v202
    %220 = vmatprep.subr.bf16.mxu0 0
    %221 = vmatpush1.bf16.msra.mxu0 %v203
    %222 = vmatprep.subr.bf16.mxu0 0
    %223 = vmatpush1.bf16.msra.mxu0 %v204
    %224 = vmatprep.subr.bf16.mxu0 0
    %225 = vmatpush1.bf16.msra.mxu0 %v205
    %226 = vmatprep.subr.bf16.mxu0 0
    %227 = vmatpush1.bf16.msra.mxu0 %v206
    %228 = vmatprep.subr.bf16.mxu0 0
    %229 = vmatpush1.bf16.msra.mxu0 %v207
    %230 = vmatprep.subr.bf16.mxu0 0
    %231 = vmatpush1.bf16.msra.mxu0 %v208
    %232 = vmatprep.subr.bf16.mxu0 0
    %233 = vmatpush1.bf16.msra.mxu0 %v209
    %234 = vmatprep.subr.bf16.mxu0 0
    %235 = vmatpush1.bf16.msra.mxu0 0
    %236 = vmatprep.subr.bf16.mxu0 0
    %237 = vmatpush1.bf16.msra.mxu0 0
    %238 = vmatprep.subr.bf16.mxu0 0
    %239 = vmatpush1.bf16.msra.mxu0 0
    %240 = vmatprep.subr.bf16.mxu0 0
    %241 = vmatpush1.bf16.msra.mxu0 0
    %242 = vmatprep.subr.bf16.mxu0 0
    %243 = vmatpush1.bf16.msra.mxu0 0
    %244 = vmatprep.subr.bf16.mxu0 0
    %245 = vmatpush1.bf16.msra.mxu0 0
    %246 = vmatprep.subr.bf16.mxu0 0
    %247 = vmatpush1.bf16.msra.mxu0 0
    %248 = vmatprep.subr.bf16.mxu0 0
    %249 = vmatpush1.bf16.msra.mxu0 0
    %250 = vmatprep.mubr.bf16.mxu0 0
    %251 = vmatmul.mubr.bf16.gmra.mrb[0].mxu0 %v146
    %v252 = vpop.f32.mrb[0].mxu0
    %v253 = vadd.f32 %v168, %v252
    %v254 = vpop.f32.mrb[0].mxu0
    %v255 = vpop.f32.mrb[0].mxu0
    %v256 = vadd.f32 %v168, %v255
    %v257 = vpop.f32.mrb[0].mxu0
    %258 = vdwg.mxu0
    %v259 = vpack.c.bf16 %v256, %v253
    %v261 = vunpack.c.l.b16 %v259
    %v262 = vunpack.c.h.b16 %v259
    %v263 = vpack.c.b16 %v261, %v261
    %v264 = vpack.c.b16 %v262, %v262
    %267 = vst [vmem:[#allocation8] sm:$0xf] %v263
    %268 = vst [vmem:[#allocation8 + $0x4] sm:$0xf] %v264
    // Predicated region
    $region34: #{tpu_custom_call.1} parent=1 // pred_check
      _
    $region35: #{tpu_custom_call.1} parent=1 // pred_check_branch
      %270 = sbr.rel (0) target = $region37
    $region36: #{tpu_custom_call.1} parent=1 // pred_region
      %s272 = ssub.s32 128, 128
      %273 = vsyncadd [#allocation4], %s272
      %s274 = sshll.u32 [#allocation8], 4
      %s275 = int_to_ptr.vmem [resolvable:$true] %s274
      %280 = dma.vmem_to_hbm [thread:$0]  %s275, 128, %s5, [#allocation4], 64, 64, 4
    $region37: #{tpu_custom_call.1} parent=1 // pred_fallthru
      _
    // Predicated region
    $region38: #{tpu_custom_call.1} parent=1 // pred_check
      _
    $region39: #{tpu_custom_call.1} parent=1 // pred_check_branch
      %282 = sbr.rel (0) target = $region41
    $region40: #{tpu_custom_call.1} parent=1 // pred_region
      %283 = dma.done [#allocation4], 128
    $region41: #{tpu_custom_call.1} parent=1 // pred_fallthru
      _
    %284 = vsyncpa [#allocation3], 1
    %285 = vsyncpa [#allocation6], 1
    %286 = vsyncpa [#allocation4], 1

</llo_original>
